<compile_context>
chip_gen: v7x
topology: tpu7x:2x2x1
jax: 0.10.0
libtpu: 0.0.40
codegen_flags: <defaults>
</compile_context>

<pallas_src>
import functools

import jax
import jax.numpy as jnp
from jax.experimental import pallas as pl
from jax.experimental.pallas import tpu as pltpu


def _mlp_kernel(*refs, num_linears, compute_dtype):
    """Fused MLP forward in transposed (feature, batch) layout.

    refs = (x_ref, w0_ref, b0_ref, w1_ref, b1_ref, ..., out_ref)
      x_ref:   (in_dim, tile)      batch on the 128-lane axis
      w_ref:   (out_dim, in_dim)   PyTorch weight layout, already compute_dtype
      b_ref:   (out_dim, 1)        f32, broadcasts over the lane (batch) axis
      out_ref: (out_dim, tile)     lane-dense (unmasked) store
    ReLU after every linear except the last one.  Matmul accumulation is
    always f32 (preferred_element_type); inter-layer activations are carried
    in compute_dtype (f32 or bf16).
    """
    x_ref = refs[0]
    out_ref = refs[-1]
    param_refs = refs[1:-1]

    # TODO(synk): for the in_dim=2 first layer a pair of VPU broadcast-FMA
    # outer products would skip a <2%-utilized MXU pass; low priority (kernel
    # is DMA/overhead-bound), so the plain dot is kept.
    h = x_ref[...].astype(compute_dtype)                    # (in_dim, tile)
    for li in range(num_linears):
        w = param_refs[2 * li][...]                          # (out, in) compute_dtype
        b = param_refs[2 * li + 1][...].astype(jnp.float32)  # (out, 1) f32
        acc = jnp.dot(w, h, preferred_element_type=jnp.float32) + b
        if li != num_linears - 1:
            acc = jnp.maximum(acc, 0.0)                       # ReLU (f32 on VPU)
            h = acc.astype(compute_dtype)
        else:
            h = acc
    out_ref[...] = h.astype(out_ref.dtype)


def _round_up(x, m):
    return -(-x // m) * m


def neural_network_2d_forward(
    x,
    weights,
    biases,
    *,
    batch_tile=16384,
    compute_dtype=jnp.float32,
    out_dtype=jnp.float32,
    transposed_io=False,
    vmem_limit_bytes=48 * 1024 * 1024,
):
    """Run the fused MLP Pallas kernel.

    Standard mode (transposed_io=False):
        x: (B, 2) float32  ->  returns (B, out_dim)
    Transposed mode (transposed_io=True), avoids both wrapper relayout copies:
        x: (2, B) float32  ->  returns (out_dim, B)

    weights: list of (out_dim, in_dim) float32 arrays (PyTorch layout)
    biases:  list of (out_dim,) float32 arrays
    """
    num_linears = len(weights)
    out_dim = weights[-1].shape[0]

    if transposed_io:
        in_dim, B = x.shape
    else:
        B, in_dim = x.shape

    # ---- batch tile selection (lane-aligned, multiple of 128) -------------
    tile = min(batch_tile, _round_up(B, 128))
    tile = max(128, (tile // 128) * 128)
    B_pad = _round_up(B, tile)
    # Guarantee >= 2 grid steps when the batch allows it, so the "parallel"
    # grid axis has work to shard across v7x's two TensorCores.
    if B_pad // tile < 2 and tile >= 256:
        tile = max(128, (tile // 2 // 128) * 128)
        B_pad = _round_up(B, tile)
    grid = (B_pad // tile,)

    # ---- layout plumbing (fused into the pallas_call read when possible) --
    if transposed_io:
        x_t = x if B_pad == B else jnp.pad(x, ((0, 0), (0, B_pad - B)))
    else:
        x_pad = x if B_pad == B else jnp.pad(x, ((0, B_pad - B), (0, 0)))
        x_t = x_pad.T                                   # (in_dim, B_pad)

    # Cast weights ONCE here (not per grid step inside the kernel).
    weights_c = [w.astype(compute_dtype) for w in weights]
    biases_col = [b.reshape(-1, 1).astype(jnp.float32) for b in biases]

    # x streams per grid step; weights/biases are tiny and replicated
    # (constant index_map -> DMA'd once, resident across steps).
    # TODO(synk): mark the replicated weight/bias specs with
    # pipeline_mode=pl.Buffered(1) to drop their dead second buffer once
    # single-buffered pipeline_mode is confirmed on the target jax build.
    in_specs = [pl.BlockSpec((in_dim, tile), lambda i: (0, i))]
    params = []
    for w, b in zip(weights_c, biases_col):
        in_specs.append(pl.BlockSpec(w.shape, lambda i: (0, 0)))
        in_specs.append(pl.BlockSpec(b.shape, lambda i: (0, 0)))
        params.extend([w, b])

    out_specs = pl.BlockSpec((out_dim, tile), lambda i: (0, i))

    kernel = functools.partial(
        _mlp_kernel, num_linears=num_linears, compute_dtype=compute_dtype)

    flops = 2 * B_pad * sum(int(w.shape[0]) * int(w.shape[1]) for w in weights)
    bytes_accessed = int(
        B_pad * in_dim * x.dtype.itemsize
        + B_pad * out_dim * jnp.dtype(out_dtype).itemsize
        + sum(int(w.size) * w.dtype.itemsize for w in weights_c)
        + sum(int(b.size) * b.dtype.itemsize for b in biases_col))
    cost = pl.CostEstimate(flops=flops, transcendentals=0,
                           bytes_accessed=bytes_accessed)

    out_t = pl.pallas_call(
        kernel,
        out_shape=jax.ShapeDtypeStruct((out_dim, B_pad), out_dtype),
        grid_spec=pltpu.PrefetchScalarGridSpec(
            num_scalar_prefetch=0,
            grid=grid,
            in_specs=in_specs,
            out_specs=out_specs,
        ),
        compiler_params=pltpu.CompilerParams(
            dimension_semantics=("parallel",),      # shards steps across TCs on v7x
            vmem_limit_bytes=vmem_limit_bytes,      # room for tiles up to ~65536 lanes
            # Let XLA fuse the pad+transpose producer of x into the kernel's
            # operand read instead of materializing an extra HBM copy.
            allow_input_fusion=[True] + [False] * (2 * num_linears),
        ),
        cost_estimate=cost,
    )(x_t, *params)

    if B_pad != B:
        out_t = out_t[:, :B]
    # Transposed mode returns lane-major (out_dim, B) directly — no extra
    # relayout pass.  Standard mode restores the PyTorch (B, out_dim) layout.
    return out_t if transposed_io else out_t.T


def init_params(key, data_dim, hidden_dim, num_layers):
    """Xavier-normal weights (PyTorch (out, in) layout), zero biases
    (matches NeuralNetwork2D._initialize_weights)."""
    input_dim = 2
    dims = [input_dim] + [hidden_dim] * num_layers + [data_dim]
    weights, biases = [], []
    for i in range(len(dims) - 1):
        fan_in, fan_out = dims[i], dims[i + 1]
        key, sub = jax.random.split(key)
        std = (2.0 / (fan_in + fan_out)) ** 0.5
        w = std * jax.random.normal(sub, (fan_out, fan_in), dtype=jnp.float32)
        b = jnp.zeros((fan_out,), dtype=jnp.float32)
        weights.append(w)
        biases.append(b)
    return weights, biases


def reference_forward(x, weights, biases):
    """Pure-JAX reference of the PyTorch forward pass (y = x @ W.T + b)."""
    h = x
    n = len(weights)
    for i, (w, b) in enumerate(zip(weights, biases)):
        h = h @ w.T + b
        if i != n - 1:
            h = jnp.maximum(h, 0.0)
    return h


if __name__ == "__main__":
    # Small shapes consistent with the module; batch not a multiple of the
    # tile to exercise the padded-batch path and the >=2-grid-step logic.
    data_dim = 4        # output_dim
    hidden_dim = 32
    num_layers = 3      # -> 4 Linear layers total
    batch = 200

    key = jax.random.PRNGKey(0)
    key, kx = jax.random.split(key)
    x = jax.random.normal(kx, (batch, 2), dtype=jnp.float32)
    weights, biases = init_params(key, data_dim, hidden_dim, num_layers)

    ref = reference_forward(x, weights, biases)

    fwd = jax.jit(
        neural_network_2d_forward,
        static_argnames=("batch_tile", "compute_dtype", "out_dtype",
                         "transposed_io", "vmem_limit_bytes"))

    # 1) f32 path, standard (B, 2) -> (B, out_dim) layout.
    out = jax.block_until_ready(fwd(x, weights, biases))
    assert out.shape == (batch, data_dim)
    assert jnp.allclose(out, ref, atol=1e-5, rtol=1e-5)

    # 2) Transposed-I/O path: no wrapper pad/transpose copies on input/output.
    out_t = jax.block_until_ready(fwd(x.T, weights, biases, transposed_io=True))
    assert out_t.shape == (data_dim, batch)
    assert jnp.allclose(out_t.T, ref, atol=1e-5, rtol=1e-5)

    # 3) bf16-intermediate path (halves VMEM/VPU traffic on v6e/v7x).
    out_bf16 = jax.block_until_ready(
        fwd(x, weights, biases, compute_dtype=jnp.bfloat16))
    assert out_bf16.shape == (batch, data_dim)
    assert jnp.allclose(out_bf16, ref, atol=5e-2, rtol=5e-2)

    print("KERNEL_OK")
</pallas_src>

<mosaic_0001>
module attributes {stable_mosaic.version = 11 : i64} {
  func.func @_mlp_kernel(%arg0: i32, %arg1: memref<2x128xf32, #tpu.memory_space<vmem>>, %arg2: memref<32x2xf32, #tpu.memory_space<vmem>>, %arg3: memref<32x1xf32, #tpu.memory_space<vmem>>, %arg4: memref<32x32xf32, #tpu.memory_space<vmem>>, %arg5: memref<32x1xf32, #tpu.memory_space<vmem>>, %arg6: memref<32x32xf32, #tpu.memory_space<vmem>>, %arg7: memref<32x1xf32, #tpu.memory_space<vmem>>, %arg8: memref<4x32xf32, #tpu.memory_space<vmem>>, %arg9: memref<4x1xf32, #tpu.memory_space<vmem>>, %arg10: memref<4x128xf32, #tpu.memory_space<vmem>>) attributes {dimension_semantics = [#tpu.dimension_semantics<parallel>], iteration_bounds = array<i64: 2>, scalar_prefetch = 0 : i64, scratch_operands = 0 : i64, tpu.core_type = #tpu.core_type<tc>, window_params = [{transform_indices = @transform_0, window_bounds = array<i64: 2, 128>}, {pipeline_mode = #tpu.pipeline_mode<synchronous>, transform_indices = @transform_1, window_bounds = array<i64: 32, 2>}, {pipeline_mode = #tpu.pipeline_mode<synchronous>, transform_indices = @transform_2, window_bounds = array<i64: 32, 1>}, {pipeline_mode = #tpu.pipeline_mode<synchronous>, transform_indices = @transform_3, window_bounds = array<i64: 32, 32>}, {pipeline_mode = #tpu.pipeline_mode<synchronous>, transform_indices = @transform_4, window_bounds = array<i64: 32, 1>}, {pipeline_mode = #tpu.pipeline_mode<synchronous>, transform_indices = @transform_5, window_bounds = array<i64: 32, 32>}, {pipeline_mode = #tpu.pipeline_mode<synchronous>, transform_indices = @transform_6, window_bounds = array<i64: 32, 1>}, {pipeline_mode = #tpu.pipeline_mode<synchronous>, transform_indices = @transform_7, window_bounds = array<i64: 4, 32>}, {pipeline_mode = #tpu.pipeline_mode<synchronous>, transform_indices = @transform_8, window_bounds = array<i64: 4, 1>}, {transform_indices = @transform_9, window_bounds = array<i64: 4, 128>}]} {
    %c0 = arith.constant 0 : index
    %c0_0 = arith.constant 0 : index
    %0 = vector.load %arg1[%c0, %c0_0] : memref<2x128xf32, #tpu.memory_space<vmem>>, vector<2x128xf32>
    %c0_1 = arith.constant 0 : index
    %c0_2 = arith.constant 0 : index
    %1 = vector.load %arg2[%c0_1, %c0_2] : memref<32x2xf32, #tpu.memory_space<vmem>>, vector<32x2xf32>
    %c0_3 = arith.constant 0 : index
    %c0_4 = arith.constant 0 : index
    %2 = vector.load %arg3[%c0_3, %c0_4] : memref<32x1xf32, #tpu.memory_space<vmem>>, vector<32x1xf32>
    %cst = arith.constant dense<0.000000e+00> : vector<32x128xf32>
    %3 = tpu.matmul %1, %0, %cst {dimension_numbers = #tpu.dot_dimension_numbers<[1], [0], [0], [1], [0, 0, 1, 1], [], []>} : vector<32x2xf32>, vector<2x128xf32>, vector<32x128xf32> -> vector<32x128xf32>
    %4 = vector.broadcast %2 : vector<32x1xf32> to vector<32x128xf32>
    %5 = arith.addf %3, %4 : vector<32x128xf32>
    %cst_5 = arith.constant 0.000000e+00 : f32
    %6 = vector.broadcast %cst_5 : f32 to vector<32x128xf32>
    %7 = arith.maximumf %5, %6 : vector<32x128xf32>
    %c0_6 = arith.constant 0 : index
    %c0_7 = arith.constant 0 : index
    %8 = vector.load %arg4[%c0_6, %c0_7] : memref<32x32xf32, #tpu.memory_space<vmem>>, vector<32x32xf32>
    %c0_8 = arith.constant 0 : index
    %c0_9 = arith.constant 0 : index
    %9 = vector.load %arg5[%c0_8, %c0_9] : memref<32x1xf32, #tpu.memory_space<vmem>>, vector<32x1xf32>
    %cst_10 = arith.constant dense<0.000000e+00> : vector<32x128xf32>
    %10 = tpu.matmul %8, %7, %cst_10 {dimension_numbers = #tpu.dot_dimension_numbers<[1], [0], [0], [1], [0, 0, 1, 1], [], []>} : vector<32x32xf32>, vector<32x128xf32>, vector<32x128xf32> -> vector<32x128xf32>
    %11 = vector.broadcast %9 : vector<32x1xf32> to vector<32x128xf32>
    %12 = arith.addf %10, %11 : vector<32x128xf32>
    %cst_11 = arith.constant 0.000000e+00 : f32
    %13 = vector.broadcast %cst_11 : f32 to vector<32x128xf32>
    %14 = arith.maximumf %12, %13 : vector<32x128xf32>
    %c0_12 = arith.constant 0 : index
    %c0_13 = arith.constant 0 : index
    %15 = vector.load %arg6[%c0_12, %c0_13] : memref<32x32xf32, #tpu.memory_space<vmem>>, vector<32x32xf32>
    %c0_14 = arith.constant 0 : index
    %c0_15 = arith.constant 0 : index
    %16 = vector.load %arg7[%c0_14, %c0_15] : memref<32x1xf32, #tpu.memory_space<vmem>>, vector<32x1xf32>
    %cst_16 = arith.constant dense<0.000000e+00> : vector<32x128xf32>
    %17 = tpu.matmul %15, %14, %cst_16 {dimension_numbers = #tpu.dot_dimension_numbers<[1], [0], [0], [1], [0, 0, 1, 1], [], []>} : vector<32x32xf32>, vector<32x128xf32>, vector<32x128xf32> -> vector<32x128xf32>
    %18 = vector.broadcast %16 : vector<32x1xf32> to vector<32x128xf32>
    %19 = arith.addf %17, %18 : vector<32x128xf32>
    %cst_17 = arith.constant 0.000000e+00 : f32
    %20 = vector.broadcast %cst_17 : f32 to vector<32x128xf32>
    %21 = arith.maximumf %19, %20 : vector<32x128xf32>
    %c0_18 = arith.constant 0 : index
    %c0_19 = arith.constant 0 : index
    %22 = vector.load %arg8[%c0_18, %c0_19] : memref<4x32xf32, #tpu.memory_space<vmem>>, vector<4x32xf32>
    %c0_20 = arith.constant 0 : index
    %c0_21 = arith.constant 0 : index
    %23 = vector.load %arg9[%c0_20, %c0_21] : memref<4x1xf32, #tpu.memory_space<vmem>>, vector<4x1xf32>
    %cst_22 = arith.constant dense<0.000000e+00> : vector<4x128xf32>
    %24 = tpu.matmul %22, %21, %cst_22 {dimension_numbers = #tpu.dot_dimension_numbers<[1], [0], [0], [1], [0, 0, 1, 1], [], []>} : vector<4x32xf32>, vector<32x128xf32>, vector<4x128xf32> -> vector<4x128xf32>
    %25 = vector.broadcast %23 : vector<4x1xf32> to vector<4x128xf32>
    %26 = arith.addf %24, %25 : vector<4x128xf32>
    %c0_23 = arith.constant 0 : index
    %c0_24 = arith.constant 0 : index
    %27 = vector.load %arg10[%c0_23, %c0_24] : memref<4x128xf32, #tpu.memory_space<vmem>>, vector<4x128xf32>
    tpu.vector_store %arg10[%c0_23, %c0_24], %26 {strides = array<i32>} : memref<4x128xf32, #tpu.memory_space<vmem>>, vector<4x128xf32>,
    return
  }
  func.func @transform_0(%arg0: i32) -> (i32, i32) {
    %c0_i32 = arith.constant 0 : i32
    %c0_i32_0 = arith.constant 0 : i32
    return %c0_i32, %arg0 : i32, i32
  }
  func.func @transform_1(%arg0: i32) -> (i32, i32) {
    %c0_i32 = arith.constant 0 : i32
    %c0_i32_0 = arith.constant 0 : i32
    %c0_i32_1 = arith.constant 0 : i32
    return %c0_i32, %c0_i32_0 : i32, i32
  }
  func.func @transform_2(%arg0: i32) -> (i32, i32) {
    %c0_i32 = arith.constant 0 : i32
    %c0_i32_0 = arith.constant 0 : i32
    %c0_i32_1 = arith.constant 0 : i32
    return %c0_i32, %c0_i32_0 : i32, i32
  }
  func.func @transform_3(%arg0: i32) -> (i32, i32) {
    %c0_i32 = arith.constant 0 : i32
    %c0_i32_0 = arith.constant 0 : i32
    %c0_i32_1 = arith.constant 0 : i32
    return %c0_i32, %c0_i32_0 : i32, i32
  }
  func.func @transform_4(%arg0: i32) -> (i32, i32) {
    %c0_i32 = arith.constant 0 : i32
    %c0_i32_0 = arith.constant 0 : i32
    %c0_i32_1 = arith.constant 0 : i32
    return %c0_i32, %c0_i32_0 : i32, i32
  }
  func.func @transform_5(%arg0: i32) -> (i32, i32) {
    %c0_i32 = arith.constant 0 : i32
    %c0_i32_0 = arith.constant 0 : i32
    %c0_i32_1 = arith.constant 0 : i32
    return %c0_i32, %c0_i32_0 : i32, i32
  }
  func.func @transform_6(%arg0: i32) -> (i32, i32) {
    %c0_i32 = arith.constant 0 : i32
    %c0_i32_0 = arith.constant 0 : i32
    %c0_i32_1 = arith.constant 0 : i32
    return %c0_i32, %c0_i32_0 : i32, i32
  }
  func.func @transform_7(%arg0: i32) -> (i32, i32) {
    %c0_i32 = arith.constant 0 : i32
    %c0_i32_0 = arith.constant 0 : i32
    %c0_i32_1 = arith.constant 0 : i32
    return %c0_i32, %c0_i32_0 : i32, i32
  }
  func.func @transform_8(%arg0: i32) -> (i32, i32) {
    %c0_i32 = arith.constant 0 : i32
    %c0_i32_0 = arith.constant 0 : i32
    %c0_i32_1 = arith.constant 0 : i32
    return %c0_i32, %c0_i32_0 : i32, i32
  }
  func.func @transform_9(%arg0: i32) -> (i32, i32) {
    %c0_i32 = arith.constant 0 : i32
    %c0_i32_0 = arith.constant 0 : i32
    return %c0_i32, %arg0 : i32, i32
  }
}

</mosaic_0001>

<llo_original>
// kernel: neural_network_2d_forward.2
$region0: #{neural_network_2d_forward.2}
  #allocation0 [shape = 'u32[]', space=smem, size = 0x4, offset = 0x4, fixed_abs, tag = 'smem constant byte address 0x4 - core index']
  #allocation1 [shape = 'u32[144,128]{1,0:T(1,128)}', space=vmem, size = 0x12000, scoped, tag = 'internal scratch']
  #allocation2 [shape = 'u32[2048]{0}', space=vmem, size = 0x2000, scoped, tag = 'scoped memory for neural_network_2d_forward.2']
  #allocation3 [shape = 'u32[2048]{0}', space=vmem, size = 0x2000, scoped, tag = 'scoped memory for neural_network_2d_forward.2']
  #allocation4 [shape = 'u32[2048]{0}', space=vmem, size = 0x2000, scoped, tag = 'scoped memory for neural_network_2d_forward.2']
  #allocation5 [shape = 'u32[2048]{0}', space=vmem, size = 0x2000, scoped, tag = 'scoped memory for neural_network_2d_forward.2']
  #allocation6 [shape = 'u32[2048]{0}', space=vmem, size = 0x2000, scoped, tag = 'scoped memory for neural_network_2d_forward.2']
  %s0 = inlined_call_operand.vmem [shape: f32[32,2], index: 0, kind: input, shape index: {}]
  %s1 = inlined_call_operand.vmem [shape: f32[32,1], index: 1, kind: input, shape index: {}]
  %s2 = inlined_call_operand.vmem [shape: f32[32,32], index: 2, kind: input, shape index: {}]
  %s3 = inlined_call_operand.vmem [shape: f32[32,1], index: 3, kind: input, shape index: {}]
  %s4 = inlined_call_operand.vmem [shape: f32[32,32], index: 4, kind: input, shape index: {}]
  %s5 = inlined_call_operand.vmem [shape: f32[32,1], index: 5, kind: input, shape index: {}]
  %s6 = inlined_call_operand.vmem [shape: f32[4,32], index: 6, kind: input, shape index: {}]
  %s7 = inlined_call_operand.vmem [shape: f32[4,1], index: 7, kind: input, shape index: {}]
  %s8 = inlined_call_operand.vmem [shape: f32[200,2], index: 8, kind: input, shape index: {}]
  %s9 = inlined_call_operand.<no memory space> [shape: f32[], index: 9, kind: input, shape index: {}]
  %s10 = inlined_call_operand.vmem [shape: f32[4,256], index: 10, kind: output, shape index: {}]
  %s11 = sld [smem:[#allocation0]]
  $region69: #{neural_network_2d_forward.2} parent=0
    _
  %s13 = ssub.s32 1, %s11
  %s14 = scalar_select 0, %s13, %s11
  %v15 = vstv %s9
  loop: start=0, step=1, limit=4
  $region2: #{neural_network_2d_forward.2} parent=0 // loop_pre_header
    _
  $region3: #{neural_network_2d_forward.2} parent=0 // loop_header
    %s17 = sphi 0, %s21
    %p18 = scmp.ge.s32.totalorder %s17, 4
    %s27 = sphi 0, %s29
    %s30 = sphi 0, %s27
    %s31 = sphi 0, %s30
    %s47 = sphi 0, %s31
    %s51 = sphi 0, %s51
    %s53 = sphi 0, %s51
    %s54 = sphi 0, %s53
    %s68 = sphi 0, %s54
    %s72 = sphi 0, %s72
    %s74 = sphi 0, %s72
    %s75 = sphi 0, %s74
    %s89 = sphi 0, %s75
    %s93 = sphi 0, %s93
    %s95 = sphi 0, %s93
    %s96 = sphi 0, %s95
    %s110 = sphi 0, %s96
    %s114 = sphi 0, %s114
    %s116 = sphi 0, %s114
    %s117 = sphi 0, %s116
    %s131 = sphi 0, %s117
    %s135 = sphi 0, %s135
    %s137 = sphi 0, %s135
    %s138 = sphi 0, %s137
    %s152 = sphi 0, %s138
    %s156 = sphi 0, %s156
    %s158 = sphi 0, %s156
    %s159 = sphi 0, %s158
    %s173 = sphi 0, %s159
    %s177 = sphi 0, %s177
    %s179 = sphi 0, %s177
    %s180 = sphi 0, %s179
    %s194 = sphi 0, %s180
    %s198 = sphi 0, %s198
    %s200 = sphi 0, %s198
    %s201 = sphi 0, %s200
    %s215 = sphi 0, %s201
    %s221 = sphi 0, %s223
    %s224 = sphi 0, %s221
    %s225 = sphi 0, %s224
    %s241 = sphi 0, %s225
  $region4: #{neural_network_2d_forward.2} parent=0 // loop_header_branch
    %20 = sbr.rel (%p18) target = $region8
  $region5: #{neural_network_2d_forward.2} parent=0 // loop_body
    %s22 = ssub.s32 %s17, 1
    %s23 = ssub.s32 %s17, 2
    %s24 = sadd.s32 %s17, 1
    %s25 = ssub.s32 %s17, %s24
    %p26 = scmp.eq.s32.totalorder %s25, 0
    %s28 = sadd.s32 %s27, 1
    %s29 = scalar_select %p26, %s27, %s28
    %p32 = pneg %p26
    %p33 = scmp.eq.s32.totalorder %s17, 1
    %p34 = por %p32, %p33
    %p35 = scmp.ne.s32.totalorder %s27, %s30
    %p36 = scmp.eq.s32.totalorder %s17, 0
    %p37 = por %p35, %p36
    %p38 = scmp.ne.s32.totalorder %s27, %s30
    %p39 = scmp.eq.s32.totalorder %s22, 1
    %p40 = por %p38, %p39
    %p41 = scmp.ne.s32.totalorder %s30, %s31
    %p42 = scmp.eq.s32.totalorder %s22, 0
    %p43 = por %p41, %p42
    %p44 = scmp.ne.s32.totalorder %s30, %s31
    %p45 = scmp.eq.s32.totalorder %s23, 1
    %p46 = por %p44, %p45
    %p48 = scmp.ne.s32.totalorder %s31, %s47
    %p49 = scmp.eq.s32.totalorder %s23, 0
    %p50 = por %p48, %p49
    %s52 = sadd.s32 %s51, 1
    %p55 = scmp.eq.s32.totalorder %s17, 1
    %p56 = scmp.ne.s32.totalorder %s51, %s53
    %p57 = scmp.eq.s32.totalorder %s17, 0
    %p58 = por %p56, %p57
    %p59 = scmp.ne.s32.totalorder %s51, %s53
    %p60 = scmp.eq.s32.totalorder %s22, 1
    %p61 = por %p59, %p60
    %p62 = scmp.ne.s32.totalorder %s53, %s54
    %p63 = scmp.eq.s32.totalorder %s22, 0
    %p64 = por %p62, %p63
    %p65 = scmp.ne.s32.totalorder %s53, %s54
    %p66 = scmp.eq.s32.totalorder %s23, 1
    %p67 = por %p65, %p66
    %p69 = scmp.ne.s32.totalorder %s54, %s68
    %p70 = scmp.eq.s32.totalorder %s23, 0
    %p71 = por %p69, %p70
    %s73 = sadd.s32 %s72, 1
    %p76 = scmp.eq.s32.totalorder %s17, 1
    %p77 = scmp.ne.s32.totalorder %s72, %s74
    %p78 = scmp.eq.s32.totalorder %s17, 0
    %p79 = por %p77, %p78
    %p80 = scmp.ne.s32.totalorder %s72, %s74
    %p81 = scmp.eq.s32.totalorder %s22, 1
    %p82 = por %p80, %p81
    %p83 = scmp.ne.s32.totalorder %s74, %s75
    %p84 = scmp.eq.s32.totalorder %s22, 0
    %p85 = por %p83, %p84
    %p86 = scmp.ne.s32.totalorder %s74, %s75
    %p87 = scmp.eq.s32.totalorder %s23, 1
    %p88 = por %p86, %p87
    %p90 = scmp.ne.s32.totalorder %s75, %s89
    %p91 = scmp.eq.s32.totalorder %s23, 0
    %p92 = por %p90, %p91
    %s94 = sadd.s32 %s93, 1
    %p97 = scmp.eq.s32.totalorder %s17, 1
    %p98 = scmp.ne.s32.totalorder %s93, %s95
    %p99 = scmp.eq.s32.totalorder %s17, 0
    %p100 = por %p98, %p99
    %p101 = scmp.ne.s32.totalorder %s93, %s95
    %p102 = scmp.eq.s32.totalorder %s22, 1
    %p103 = por %p101, %p102
    %p104 = scmp.ne.s32.totalorder %s95, %s96
    %p105 = scmp.eq.s32.totalorder %s22, 0
    %p106 = por %p104, %p105
    %p107 = scmp.ne.s32.totalorder %s95, %s96
    %p108 = scmp.eq.s32.totalorder %s23, 1
    %p109 = por %p107, %p108
    %p111 = scmp.ne.s32.totalorder %s96, %s110
    %p112 = scmp.eq.s32.totalorder %s23, 0
    %p113 = por %p111, %p112
    %s115 = sadd.s32 %s114, 1
    %p118 = scmp.eq.s32.totalorder %s17, 1
    %p119 = scmp.ne.s32.totalorder %s114, %s116
    %p120 = scmp.eq.s32.totalorder %s17, 0
    %p121 = por %p119, %p120
    %p122 = scmp.ne.s32.totalorder %s114, %s116
    %p123 = scmp.eq.s32.totalorder %s22, 1
    %p124 = por %p122, %p123
    %p125 = scmp.ne.s32.totalorder %s116, %s117
    %p126 = scmp.eq.s32.totalorder %s22, 0
    %p127 = por %p125, %p126
    %p128 = scmp.ne.s32.totalorder %s116, %s117
    %p129 = scmp.eq.s32.totalorder %s23, 1
    %p130 = por %p128, %p129
    %p132 = scmp.ne.s32.totalorder %s117, %s131
    %p133 = scmp.eq.s32.totalorder %s23, 0
    %p134 = por %p132, %p133
    %s136 = sadd.s32 %s135, 1
    %p139 = scmp.eq.s32.totalorder %s17, 1
    %p140 = scmp.ne.s32.totalorder %s135, %s137
    %p141 = scmp.eq.s32.totalorder %s17, 0
    %p142 = por %p140, %p141
    %p143 = scmp.ne.s32.totalorder %s135, %s137
    %p144 = scmp.eq.s32.totalorder %s22, 1
    %p145 = por %p143, %p144
    %p146 = scmp.ne.s32.totalorder %s137, %s138
    %p147 = scmp.eq.s32.totalorder %s22, 0
    %p148 = por %p146, %p147
    %p149 = scmp.ne.s32.totalorder %s137, %s138
    %p150 = scmp.eq.s32.totalorder %s23, 1
    %p151 = por %p149, %p150
    %p153 = scmp.ne.s32.totalorder %s138, %s152
    %p154 = scmp.eq.s32.totalorder %s23, 0
    %p155 = por %p153, %p154
    %s157 = sadd.s32 %s156, 1
    %p160 = scmp.eq.s32.totalorder %s17, 1
    %p161 = scmp.ne.s32.totalorder %s156, %s158
    %p162 = scmp.eq.s32.totalorder %s17, 0
    %p163 = por %p161, %p162
    %p164 = scmp.ne.s32.totalorder %s156, %s158
    %p165 = scmp.eq.s32.totalorder %s22, 1
    %p166 = por %p164, %p165
    %p167 = scmp.ne.s32.totalorder %s158, %s159
    %p168 = scmp.eq.s32.totalorder %s22, 0
    %p169 = por %p167, %p168
    %p170 = scmp.ne.s32.totalorder %s158, %s159
    %p171 = scmp.eq.s32.totalorder %s23, 1
    %p172 = por %p170, %p171
    %p174 = scmp.ne.s32.totalorder %s159, %s173
    %p175 = scmp.eq.s32.totalorder %s23, 0
    %p176 = por %p174, %p175
    %s178 = sadd.s32 %s177, 1
    %p181 = scmp.eq.s32.totalorder %s17, 1
    %p182 = scmp.ne.s32.totalorder %s177, %s179
    %p183 = scmp.eq.s32.totalorder %s17, 0
    %p184 = por %p182, %p183
    %p185 = scmp.ne.s32.totalorder %s177, %s179
    %p186 = scmp.eq.s32.totalorder %s22, 1
    %p187 = por %p185, %p186
    %p188 = scmp.ne.s32.totalorder %s179, %s180
    %p189 = scmp.eq.s32.totalorder %s22, 0
    %p190 = por %p188, %p189
    %p191 = scmp.ne.s32.totalorder %s179, %s180
    %p192 = scmp.eq.s32.totalorder %s23, 1
    %p193 = por %p191, %p192
    %p195 = scmp.ne.s32.totalorder %s180, %s194
    %p196 = scmp.eq.s32.totalorder %s23, 0
    %p197 = por %p195, %p196
    %s199 = sadd.s32 %s198, 1
    %p202 = scmp.eq.s32.totalorder %s17, 1
    %p203 = scmp.ne.s32.totalorder %s198, %s200
    %p204 = scmp.eq.s32.totalorder %s17, 0
    %p205 = por %p203, %p204
    %p206 = scmp.ne.s32.totalorder %s198, %s200
    %p207 = scmp.eq.s32.totalorder %s22, 1
    %p208 = por %p206, %p207
    %p209 = scmp.ne.s32.totalorder %s200, %s201
    %p210 = scmp.eq.s32.totalorder %s22, 0
    %p211 = por %p209, %p210
    %p212 = scmp.ne.s32.totalorder %s200, %s201
    %p213 = scmp.eq.s32.totalorder %s23, 1
    %p214 = por %p212, %p213
    %p216 = scmp.ne.s32.totalorder %s201, %s215
    %p217 = scmp.eq.s32.totalorder %s23, 0
    %p218 = por %p216, %p217
    %s219 = ssub.s32 %s17, %s24
    %p220 = scmp.eq.s32.totalorder %s219, 0
    %s222 = sadd.s32 %s221, 1
    %s223 = scalar_select %p220, %s221, %s222
    %p226 = pneg %p220
    %p227 = scmp.eq.s32.totalorder %s17, 1
    %p228 = por %p226, %p227
    %p229 = scmp.ne.s32.totalorder %s221, %s224
    %p230 = scmp.eq.s32.totalorder %s17, 0
    %p231 = por %p229, %p230
    %p232 = scmp.ne.s32.totalorder %s221, %s224
    %p233 = scmp.eq.s32.totalorder %s22, 1
    %p234 = por %p232, %p233
    %p235 = scmp.ne.s32.totalorder %s224, %s225
    %p236 = scmp.eq.s32.totalorder %s22, 0
    %p237 = por %p235, %p236
    %p238 = scmp.ne.s32.totalorder %s224, %s225
    %p239 = scmp.eq.s32.totalorder %s23, 1
    %p240 = por %p238, %p239
    %p242 = scmp.ne.s32.totalorder %s225, %s241
    %p243 = scmp.eq.s32.totalorder %s23, 0
    %p244 = por %p242, %p243
    %p245 = scmp.le.s32.totalorder 1, %s17
    %p246 = scmp.lt.s32.totalorder %s17, 3
    %p247 = pnand %p245, %p246
    %p248 = pneg %p247
    // Predicated region
    $region9: #{neural_network_2d_forward.2} parent=5 // pred_check
      _
    $region10: #{neural_network_2d_forward.2} parent=5 // pred_check_branch
      %250 = sbr.rel (%p247) target = $region12
    $region11: #{neural_network_2d_forward.2} parent=5 // pred_region
      %s251 = ssub.s32 %s17, 1
      // Predicated region
      $region13: #{neural_network_2d_forward.2} parent=11 // pred_check
        %p252 = pneg %p64
      $region14: #{neural_network_2d_forward.2} parent=11 // pred_check_branch
        %254 = sbr.rel (%p252) target = $region16
      $region15: #{neural_network_2d_forward.2} parent=11 // pred_region
        _
      $region16: #{neural_network_2d_forward.2} parent=11 // pred_fallthru
        _
      // Predicated region
      $region17: #{neural_network_2d_forward.2} parent=11 // pred_check
        %p255 = pneg %p85
      $region18: #{neural_network_2d_forward.2} parent=11 // pred_check_branch
        %257 = sbr.rel (%p255) target = $region20
      $region19: #{neural_network_2d_forward.2} parent=11 // pred_region
        _
      $region20: #{neural_network_2d_forward.2} parent=11 // pred_fallthru
        _
      // Predicated region
      $region21: #{neural_network_2d_forward.2} parent=11 // pred_check
        %p258 = pneg %p106
      $region22: #{neural_network_2d_forward.2} parent=11 // pred_check_branch
        %260 = sbr.rel (%p258) target = $region24
      $region23: #{neural_network_2d_forward.2} parent=11 // pred_region
        _
      $region24: #{neural_network_2d_forward.2} parent=11 // pred_fallthru
        _
      // Predicated region
      $region25: #{neural_network_2d_forward.2} parent=11 // pred_check
        %p261 = pneg %p127
      $region26: #{neural_network_2d_forward.2} parent=11 // pred_check_branch
        %263 = sbr.rel (%p261) target = $region28
      $region27: #{neural_network_2d_forward.2} parent=11 // pred_region
        _
      $region28: #{neural_network_2d_forward.2} parent=11 // pred_fallthru
        _
      // Predicated region
      $region29: #{neural_network_2d_forward.2} parent=11 // pred_check
        %p264 = pneg %p148
      $region30: #{neural_network_2d_forward.2} parent=11 // pred_check_branch
        %266 = sbr.rel (%p264) target = $region32
      $region31: #{neural_network_2d_forward.2} parent=11 // pred_region
        _
      $region32: #{neural_network_2d_forward.2} parent=11 // pred_fallthru
        _
      // Predicated region
      $region33: #{neural_network_2d_forward.2} parent=11 // pred_check
        %p267 = pneg %p169
      $region34: #{neural_network_2d_forward.2} parent=11 // pred_check_branch
        %269 = sbr.rel (%p267) target = $region36
      $region35: #{neural_network_2d_forward.2} parent=11 // pred_region
        _
      $region36: #{neural_network_2d_forward.2} parent=11 // pred_fallthru
        _
      // Predicated region
      $region37: #{neural_network_2d_forward.2} parent=11 // pred_check
        %p270 = pneg %p190
      $region38: #{neural_network_2d_forward.2} parent=11 // pred_check_branch
        %272 = sbr.rel (%p270) target = $region40
      $region39: #{neural_network_2d_forward.2} parent=11 // pred_region
        _
      $region40: #{neural_network_2d_forward.2} parent=11 // pred_fallthru
        _
      // Predicated region
      $region41: #{neural_network_2d_forward.2} parent=11 // pred_check
        %p273 = pneg %p211
      $region42: #{neural_network_2d_forward.2} parent=11 // pred_check_branch
        %275 = sbr.rel (%p273) target = $region44
      $region43: #{neural_network_2d_forward.2} parent=11 // pred_region
        _
      $region44: #{neural_network_2d_forward.2} parent=11 // pred_fallthru
        _
    $region12: #{neural_network_2d_forward.2} parent=5 // pred_fallthru
      _
    %p276 = scmp.lt.s32.totalorder %s17, 2
    // Predicated region
    $region45: #{neural_network_2d_forward.2} parent=5 // pred_check
      %p277 = pneg %p276
    $region46: #{neural_network_2d_forward.2} parent=5 // pred_check_branch
      %279 = sbr.rel (%p277) target = $region48
    $region47: #{neural_network_2d_forward.2} parent=5 // pred_region
      // Predicated region
      $region49: #{neural_network_2d_forward.2} parent=47 // pred_check
        %p280 = pneg %p37
      $region50: #{neural_network_2d_forward.2} parent=47 // pred_check_branch
        %282 = sbr.rel (%p280) target = $region52
      $region51: #{neural_network_2d_forward.2} parent=47 // pred_region
        %s283 = ssub.s32 2, %s17
        %p284 = scmp.lt.s32.totalorder %s283, 1
        %s285 = scalar_select %p284, %s283, 1
        %s286 = smul.u32 32, %s285
        %p287 = scmp.lt.s32.totalorder %s17, 1
        %s288 = scalar_select %p287, %s17, 1
        %s289 = smul.addr %s288, 2
        %s290 = scalar_lea.vmem %s8, %s289
        %s291 = ssub.s32 2, %s17
        %p292 = scmp.lt.s32.totalorder %s291, 1
        %s293 = scalar_select %p292, %s291, 1
        %s294 = smul.u32 32, %s293
      $region52: #{neural_network_2d_forward.2} parent=47 // pred_fallthru
        _
    $region48: #{neural_network_2d_forward.2} parent=5 // pred_fallthru
      _
    %p295 = scmp.le.s32.totalorder 1, %s17
    %p296 = scmp.lt.s32.totalorder %s17, 3
    %p297 = pnand %p295, %p296
    %p298 = pneg %p297
    // Predicated region
    $region53: #{neural_network_2d_forward.2} parent=5 // pred_check
      _
    $region54: #{neural_network_2d_forward.2} parent=5 // pred_check_branch
      %300 = sbr.rel (%p297) target = $region56
    $region55: #{neural_network_2d_forward.2} parent=5 // pred_region
      #allocation7 [shape = 'u8[1024]{0}', space=vmem, size = 0x400, dematerialized = true, scoped, tag = 'FusionAdapter Buffer %fusion.1 = f32[2,256]{1,0:T(2,128)} fusion(%param_8.2, %param_9), kind=kLoop, calls=%fused_computation.2.clone, metadata={op_name="jit(neural_network_2d_forward)/transpose" stack_frame_id=8}']
      %s301 = ssub.s32 %s17, 1
      %s302 = ssub.s32 2, %s22
      %p303 = scmp.lt.s32.totalorder %s302, 1
      %s304 = scalar_select %p303, %s302, 1
      %s305 = smul.u32 32, %s304
      %p306 = scmp.lt.s32.totalorder %s22, 1
      %s307 = scalar_select %p306, %s22, 1
      %s308 = smul.addr %s307, 2
      %s309 = scalar_lea.vmem %s8, %s308
      %p310 = pneg %p43
      %p311 = pneg %p40
      %p312 = pneg %p64
      %p313 = pneg %p61
      %p314 = pneg %p85
      %p315 = pneg %p82
      %p316 = pneg %p106
      %p317 = pneg %p103
      %p318 = pneg %p127
      %p319 = pneg %p124
      %p320 = pneg %p148
      %p321 = pneg %p145
      %p322 = pneg %p169
      %p323 = pneg %p166
      %p324 = pneg %p190
      %p325 = pneg %p187
      %p326 = pneg %p211
      %p327 = pneg %p208
      %p328 = pneg %p237
      %p329 = pneg %p234
      %p330 = scmp.lt.s32.totalorder %s22, 1
      %s331 = scalar_select %p330, %s22, 1
      %s332 = smul.addr %s331, 4
      %s333 = scalar_lea.vmem %s10, %s332
      %s334 = ssub.s32 2, %s22
      %p335 = scmp.lt.s32.totalorder %s334, 1
      %s336 = scalar_select %p335, %s334, 1
      %s337 = smul.u32 32, %s336
      %p338 = scmp.lt.s32.totalorder %s22, 1
      %s339 = scalar_select %p338, %s22, 1
      %s340 = smul.addr %s339, 2
      %s341 = scalar_lea.vmem %s8, %s340
      %s342 = ssub.s32 2, %s22
      %p343 = scmp.lt.s32.totalorder %s342, 1
      %s344 = scalar_select %p343, %s342, 1
      %s345 = smul.u32 32, %s344
      %p346 = scmp.lt.s32.totalorder %s22, 1
      %s347 = scalar_select %p346, %s22, 1
      %s348 = smul.addr %s347, 4
      %s349 = scalar_lea.vmem %s10, %s348
      %s350 = ssub.s32 1, %s22
      %p351 = scmp.lt.s32.totalorder %s350, 0
      %s352 = scalar_select %p351, 0, 255
      %s353 = sand.u32 3, %s352
      %s354 = sand.u32 3, %s353
      %v355 = vld [vmem:[%s341] sm:%s354]
      %s356 = ssub.s32 1, %s22
      %v357 = vstv %s356
      %vm358 = vcmp.lt.s32.totalorder %v357, 0
      %v359 = vsel %vm358, %v15, %v355
      %v360 = vlaneseq
      %v361 = vshrl.u32 %v360, 7
      %vm363 = vcmp.lt.s32.totalorder %v361, 2
      %v364 = vsel %vm363, %v359, %v15
      %s365 = smul.addr %s22, 128
      %v366 = vlaneseq
      %v367 = vand.u32 %v366, 127
      %v368 = vstv %s365
      %v369 = vadd.s32 %v367, %v368
      %vm370 = vcmp.lt.s32.totalorder %v369, 200
      %v371 = vsel %vm370, %v364, %v15
      %373 = vst [vmem:[#allocation7] sm:$0x3] %v371
      %v374 = vld [vmem:[#allocation7] sm:$0x3]
      %v375 = vld [vmem:[%s0] sm:$0xff]
      %v376 = vld [vmem:[%s0 + $0x8] sm:$0xff]
      %v377 = vld [vmem:[%s0 + $0x10] sm:$0xff]
      %v378 = vld [vmem:[%s0 + $0x18] sm:$0xff]
      %v379 = vld [vmem:[%s1] sm:$0xff]
      %v380 = vld [vmem:[%s1 + $0x8] sm:$0xff]
      %v381 = vld [vmem:[%s1 + $0x10] sm:$0xff]
      %v382 = vld [vmem:[%s1 + $0x18] sm:$0xff]
      %384 = vset.pattern.permute.xlu0 0
      %385 = vperm.xlu0 %384, %v379
      %v386 = vpop.permute.xlu0 %385
      %389 = vset.pattern.permute.xlu0 0
      %390 = vperm.xlu0 %389, %v380
      %v391 = vpop.permute.xlu0 %390
      %394 = vset.pattern.permute.xlu0 0
      %395 = vperm.xlu0 %394, %v381
      %v396 = vpop.permute.xlu0 %395
      %399 = vset.pattern.permute.xlu0 0
      %400 = vperm.xlu0 %399, %v382
      %v401 = vpop.permute.xlu0 %400
      %vm403 = vcmask 15360
      %v405 = vsel %vm403, %v375, 0
      %v408 = vsel %vm403, %v376, 0
      %v411 = vsel %vm403, %v377, 0
      %v414 = vsel %vm403, %v378, 0
      %vm416 = vcmask 1041408
      %v418 = vsel %vm416, %v374, 0
      %420 = vmatprep.subr.mxu0 0.0
      %421 = vmatpush1.msra.mxu0 %v418
      %422 = vmatprep.subr.mxu0 0.0
      %423 = vmatpush1.msra.mxu0 0.0
      %424 = vmatprep.subr.mxu0 0.0
      %425 = vmatpush1.msra.mxu0 0.0
      %426 = vmatprep.subr.mxu0 0.0
      %427 = vmatpush1.msra.mxu0 0.0
      %428 = vmatprep.subr.mxu0 0.0
      %429 = vmatpush1.msra.mxu0 0.0
      %430 = vmatprep.subr.mxu0 0.0
      %431 = vmatpush1.msra.mxu0 0.0
      %432 = vmatprep.subr.mxu0 0.0
      %433 = vmatpush1.msra.mxu0 0.0
      %434 = vmatprep.subr.mxu0 0.0
      %435 = vmatpush1.msra.mxu0 0.0
      %436 = vmatprep.subr.mxu0 0.0
      %437 = vmatpush1.msra.mxu0 0.0
      %438 = vmatprep.subr.mxu0 0.0
      %439 = vmatpush1.msra.mxu0 0.0
      %440 = vmatprep.subr.mxu0 0.0
      %441 = vmatpush1.msra.mxu0 0.0
      %442 = vmatprep.subr.mxu0 0.0
      %443 = vmatpush1.msra.mxu0 0.0
      %444 = vmatprep.subr.mxu0 0.0
      %445 = vmatpush1.msra.mxu0 0.0
      %446 = vmatprep.subr.mxu0 0.0
      %447 = vmatpush1.msra.mxu0 0.0
      %448 = vmatprep.subr.mxu0 0.0
      %449 = vmatpush1.msra.mxu0 0.0
      %450 = vmatprep.subr.mxu0 0.0
      %451 = vmatpush1.msra.mxu0 0.0
      %452 = vmatprep.subr.mxu0 0.0
      %453 = vmatpush1.msra.mxu0 0.0
      %454 = vmatprep.subr.mxu0 0.0
      %455 = vmatpush1.msra.mxu0 0.0
      %456 = vmatprep.subr.mxu0 0.0
      %457 = vmatpush1.msra.mxu0 0.0
      %458 = vmatprep.subr.mxu0 0.0
      %459 = vmatpush1.msra.mxu0 0.0
      %460 = vmatprep.subr.mxu0 0.0
      %461 = vmatpush1.msra.mxu0 0.0
      %462 = vmatprep.subr.mxu0 0.0
      %463 = vmatpush1.msra.mxu0 0.0
      %464 = vmatprep.subr.mxu0 0.0
      %465 = vmatpush1.msra.mxu0 0.0
      %466 = vmatprep.subr.mxu0 0.0
      %467 = vmatpush1.msra.mxu0 0.0
      %468 = vmatprep.subr.mxu0 0.0
      %469 = vmatpush1.msra.mxu0 0.0
      %470 = vmatprep.subr.mxu0 0.0
      %471 = vmatpush1.msra.mxu0 0.0
      %472 = vmatprep.subr.mxu0 0.0
      %473 = vmatpush1.msra.mxu0 0.0
      %474 = vmatprep.subr.mxu0 0.0
      %475 = vmatpush1.msra.mxu0 0.0
      %476 = vmatprep.subr.mxu0 0.0
      %477 = vmatpush1.msra.mxu0 0.0
      %478 = vmatprep.subr.mxu0 0.0
      %479 = vmatpush1.msra.mxu0 0.0
      %480 = vmatprep.subr.mxu0 0.0
      %481 = vmatpush1.msra.mxu0 0.0
      %482 = vmatprep.subr.mxu0 0.0
      %483 = vmatpush1.msra.mxu0 0.0
      %484 = vmatprep.mubr.f32.mxu0 0.0
      %485 = vmatmul.mubr.f32.gmra.mrb[0].mxu0 %v405
      %v486 = vpop.f32.mrb[0].mxu0
      %v487 = vadd.f32 %v386, %v486
      %v488 = vpop.f32.mrb[0].mxu0
      %489 = vmatprep.mubr.f32.mxu0 0.0
      %490 = vmatmul.mubr.f32.gmra.mrb[0].mxu0 %v408
      %v491 = vpop.f32.mrb[0].mxu0
      %v492 = vadd.f32 %v391, %v491
      %v493 = vpop.f32.mrb[0].mxu0
      %494 = vmatprep.mubr.f32.mxu0 0.0
      %495 = vmatmul.mubr.f32.gmra.mrb[0].mxu0 %v411
      %v496 = vpop.f32.mrb[0].mxu0
      %v497 = vadd.f32 %v396, %v496
      %v498 = vpop.f32.mrb[0].mxu0
      %499 = vmatprep.mubr.f32.mxu0 0.0
      %500 = vmatmul.mubr.f32.gmra.mrb[0].mxu0 %v414
      %v501 = vpop.f32.mrb[0].mxu0
      %v502 = vadd.f32 %v401, %v501
      %v503 = vpop.f32.mrb[0].mxu0
      %504 = vdwg.mxu0
      %v505 = vmax.f32 %v487, 0.0
      %v506 = vmax.f32 %v492, 0.0
      %v507 = vmax.f32 %v497, 0.0
      %v508 = vmax.f32 %v502, 0.0
      %v509 = vld [vmem:[%s2] sm:$0xff]
      %v510 = vld [vmem:[%s2 + $0x8] sm:$0xff]
      %v511 = vld [vmem:[%s2 + $0x10] sm:$0xff]
      %v512 = vld [vmem:[%s2 + $0x18] sm:$0xff]
      %v513 = vld [vmem:[%s3] sm:$0xff]
      %v514 = vld [vmem:[%s3 + $0x8] sm:$0xff]
      %v515 = vld [vmem:[%s3 + $0x10] sm:$0xff]
      %v516 = vld [vmem:[%s3 + $0x18] sm:$0xff]
      %518 = vset.pattern.permute.xlu0 0
      %519 = vperm.xlu0 %518, %v513
      %v520 = vpop.permute.xlu0 %519
      %523 = vset.pattern.permute.xlu0 0
      %524 = vperm.xlu0 %523, %v514
      %v525 = vpop.permute.xlu0 %524
      %528 = vset.pattern.permute.xlu0 0
      %529 = vperm.xlu0 %528, %v515
      %v530 = vpop.permute.xlu0 %529
      %533 = vset.pattern.permute.xlu0 0
      %534 = vperm.xlu0 %533, %v516
      %v535 = vpop.permute.xlu0 %534
      %vm537 = vcmask 261120
      %v539 = vsel %vm537, %v509, 0
      %v542 = vsel %vm537, %v510, 0
      %v545 = vsel %vm537, %v511, 0
      %v548 = vsel %vm537, %v512, 0
      %550 = vmatprep.subr.mxu0 0.0
      %551 = vmatpush1.msra.mxu0 %v505
      %552 = vmatprep.subr.mxu0 0.0
      %553 = vmatpush1.msra.mxu0 %v506
      %554 = vmatprep.subr.mxu0 0.0
      %555 = vmatpush1.msra.mxu0 %v507
      %556 = vmatprep.subr.mxu0 0.0
      %557 = vmatpush1.msra.mxu0 %v508
      %558 = vmatprep.subr.mxu0 0.0
      %559 = vmatpush1.msra.mxu0 0.0
      %560 = vmatprep.subr.mxu0 0.0
      %561 = vmatpush1.msra.mxu0 0.0
      %562 = vmatprep.subr.mxu0 0.0
      %563 = vmatpush1.msra.mxu0 0.0
      %564 = vmatprep.subr.mxu0 0.0
      %565 = vmatpush1.msra.mxu0 0.0
      %566 = vmatprep.subr.mxu0 0.0
      %567 = vmatpush1.msra.mxu0 0.0
      %568 = vmatprep.subr.mxu0 0.0
      %569 = vmatpush1.msra.mxu0 0.0
      %570 = vmatprep.subr.mxu0 0.0
      %571 = vmatpush1.msra.mxu0 0.0
      %572 = vmatprep.subr.mxu0 0.0
      %573 = vmatpush1.msra.mxu0 0.0
      %574 = vmatprep.subr.mxu0 0.0
      %575 = vmatpush1.msra.mxu0 0.0
      %576 = vmatprep.subr.mxu0 0.0
      %577 = vmatpush1.msra.mxu0 0.0
      %578 = vmatprep.subr.mxu0 0.0
      %579 = vmatpush1.msra.mxu0 0.0
      %580 = vmatprep.subr.mxu0 0.0
      %581 = vmatpush1.msra.mxu0 0.0
      %582 = vmatprep.subr.mxu0 0.0
      %583 = vmatpush1.msra.mxu0 0.0
      %584 = vmatprep.subr.mxu0 0.0
      %585 = vmatpush1.msra.mxu0 0.0
      %586 = vmatprep.subr.mxu0 0.0
      %587 = vmatpush1.msra.mxu0 0.0
      %588 = vmatprep.subr.mxu0 0.0
      %589 = vmatpush1.msra.mxu0 0.0
      %590 = vmatprep.subr.mxu0 0.0
      %591 = vmatpush1.msra.mxu0 0.0
      %592 = vmatprep.subr.mxu0 0.0
      %593 = vmatpush1.msra.mxu0 0.0
      %594 = vmatprep.subr.mxu0 0.0
      %595 = vmatpush1.msra.mxu0 0.0
      %596 = vmatprep.subr.mxu0 0.0
      %597 = vmatpush1.msra.mxu0 0.0
      %598 = vmatprep.subr.mxu0 0.0
      %599 = vmatpush1.msra.mxu0 0.0
      %600 = vmatprep.subr.mxu0 0.0
      %601 = vmatpush1.msra.mxu0 0.0
      %602 = vmatprep.subr.mxu0 0.0
      %603 = vmatpush1.msra.mxu0 0.0
      %604 = vmatprep.subr.mxu0 0.0
      %605 = vmatpush1.msra.mxu0 0.0
      %606 = vmatprep.subr.mxu0 0.0
      %607 = vmatpush1.msra.mxu0 0.0
      %608 = vmatprep.subr.mxu0 0.0
      %609 = vmatpush1.msra.mxu0 0.0
      %610 = vmatprep.subr.mxu0 0.0
      %611 = vmatpush1.msra.mxu0 0.0
      %612 = vmatprep.subr.mxu0 0.0
      %613 = vmatpush1.msra.mxu0 0.0
      %614 = vmatprep.mubr.f32.mxu0 0.0
      %615 = vmatmul.mubr.f32.gmra.mrb[0].mxu0 %v539
      %v616 = vpop.f32.mrb[0].mxu0
      %v617 = vadd.f32 %v520, %v616
      %v618 = vpop.f32.mrb[0].mxu0
      %619 = vmatprep.mubr.f32.mxu0 0.0
      %620 = vmatmul.mubr.f32.gmra.mrb[0].mxu0 %v542
      %v621 = vpop.f32.mrb[0].mxu0
      %v622 = vadd.f32 %v525, %v621
      %v623 = vpop.f32.mrb[0].mxu0
      %624 = vmatprep.mubr.f32.mxu0 0.0
      %625 = vmatmul.mubr.f32.gmra.mrb[0].mxu0 %v545
      %v626 = vpop.f32.mrb[0].mxu0
      %v627 = vadd.f32 %v530, %v626
      %v628 = vpop.f32.mrb[0].mxu0
      %629 = vmatprep.mubr.f32.mxu0 0.0
      %630 = vmatmul.mubr.f32.gmra.mrb[0].mxu0 %v548
      %v631 = vpop.f32.mrb[0].mxu0
      %v632 = vadd.f32 %v535, %v631
      %v633 = vpop.f32.mrb[0].mxu0
      %634 = vdwg.mxu0
      %v635 = vmax.f32 %v617, 0.0
      %v636 = vmax.f32 %v622, 0.0
      %v637 = vmax.f32 %v627, 0.0
      %v638 = vmax.f32 %v632, 0.0
      %v639 = vld [vmem:[%s4] sm:$0xff]
      %v640 = vld [vmem:[%s4 + $0x8] sm:$0xff]
      %v641 = vld [vmem:[%s4 + $0x10] sm:$0xff]
      %v642 = vld [vmem:[%s4 + $0x18] sm:$0xff]
      %v643 = vld [vmem:[%s5] sm:$0xff]
      %v644 = vld [vmem:[%s5 + $0x8] sm:$0xff]
      %v645 = vld [vmem:[%s5 + $0x10] sm:$0xff]
      %v646 = vld [vmem:[%s5 + $0x18] sm:$0xff]
      %648 = vset.pattern.permute.xlu0 0
      %649 = vperm.xlu0 %648, %v643
      %v650 = vpop.permute.xlu0 %649
      %653 = vset.pattern.permute.xlu0 0
      %654 = vperm.xlu0 %653, %v644
      %v655 = vpop.permute.xlu0 %654
      %658 = vset.pattern.permute.xlu0 0
      %659 = vperm.xlu0 %658, %v645
      %v660 = vpop.permute.xlu0 %659
      %663 = vset.pattern.permute.xlu0 0
      %664 = vperm.xlu0 %663, %v646
      %v665 = vpop.permute.xlu0 %664
      %v668 = vsel %vm537, %v639, 0
      %v671 = vsel %vm537, %v640, 0
      %v674 = vsel %vm537, %v641, 0
      %v677 = vsel %vm537, %v642, 0
      %679 = vmatprep.subr.mxu0 0.0
      %680 = vmatpush1.msra.mxu0 %v635
      %681 = vmatprep.subr.mxu0 0.0
      %682 = vmatpush1.msra.mxu0 %v636
      %683 = vmatprep.subr.mxu0 0.0
      %684 = vmatpush1.msra.mxu0 %v637
      %685 = vmatprep.subr.mxu0 0.0
      %686 = vmatpush1.msra.mxu0 %v638
      %687 = vmatprep.subr.mxu0 0.0
      %688 = vmatpush1.msra.mxu0 0.0
      %689 = vmatprep.subr.mxu0 0.0
      %690 = vmatpush1.msra.mxu0 0.0
      %691 = vmatprep.subr.mxu0 0.0
      %692 = vmatpush1.msra.mxu0 0.0
      %693 = vmatprep.subr.mxu0 0.0
      %694 = vmatpush1.msra.mxu0 0.0
      %695 = vmatprep.subr.mxu0 0.0
      %696 = vmatpush1.msra.mxu0 0.0
      %697 = vmatprep.subr.mxu0 0.0
      %698 = vmatpush1.msra.mxu0 0.0
      %699 = vmatprep.subr.mxu0 0.0
      %700 = vmatpush1.msra.mxu0 0.0
      %701 = vmatprep.subr.mxu0 0.0
      %702 = vmatpush1.msra.mxu0 0.0
      %703 = vmatprep.subr.mxu0 0.0
      %704 = vmatpush1.msra.mxu0 0.0
      %705 = vmatprep.subr.mxu0 0.0
      %706 = vmatpush1.msra.mxu0 0.0
      %707 = vmatprep.subr.mxu0 0.0
      %708 = vmatpush1.msra.mxu0 0.0
      %709 = vmatprep.subr.mxu0 0.0
      %710 = vmatpush1.msra.mxu0 0.0
      %711 = vmatprep.subr.mxu0 0.0
      %712 = vmatpush1.msra.mxu0 0.0
      %713 = vmatprep.subr.mxu0 0.0
      %714 = vmatpush1.msra.mxu0 0.0
      %715 = vmatprep.subr.mxu0 0.0
      %716 = vmatpush1.msra.mxu0 0.0
      %717 = vmatprep.subr.mxu0 0.0
      %718 = vmatpush1.msra.mxu0 0.0
      %719 = vmatprep.subr.mxu0 0.0
      %720 = vmatpush1.msra.mxu0 0.0
      %721 = vmatprep.subr.mxu0 0.0
      %722 = vmatpush1.msra.mxu0 0.0
      %723 = vmatprep.subr.mxu0 0.0
      %724 = vmatpush1.msra.mxu0 0.0
      %725 = vmatprep.subr.mxu0 0.0
      %726 = vmatpush1.msra.mxu0 0.0
      %727 = vmatprep.subr.mxu0 0.0
      %728 = vmatpush1.msra.mxu0 0.0
      %729 = vmatprep.subr.mxu0 0.0
      %730 = vmatpush1.msra.mxu0 0.0
      %731 = vmatprep.subr.mxu0 0.0
      %732 = vmatpush1.msra.mxu0 0.0
      %733 = vmatprep.subr.mxu0 0.0
      %734 = vmatpush1.msra.mxu0 0.0
      %735 = vmatprep.subr.mxu0 0.0
      %736 = vmatpush1.msra.mxu0 0.0
      %737 = vmatprep.subr.mxu0 0.0
      %738 = vmatpush1.msra.mxu0 0.0
      %739 = vmatprep.subr.mxu0 0.0
      %740 = vmatpush1.msra.mxu0 0.0
      %741 = vmatprep.subr.mxu0 0.0
      %742 = vmatpush1.msra.mxu0 0.0
      %743 = vmatprep.mubr.f32.mxu0 0.0
      %744 = vmatmul.mubr.f32.gmra.mrb[0].mxu0 %v668
      %v745 = vpop.f32.mrb[0].mxu0
      %v746 = vadd.f32 %v650, %v745
      %v747 = vpop.f32.mrb[0].mxu0
      %748 = vmatprep.mubr.f32.mxu0 0.0
      %749 = vmatmul.mubr.f32.gmra.mrb[0].mxu0 %v671
      %v750 = vpop.f32.mrb[0].mxu0
      %v751 = vadd.f32 %v655, %v750
      %v752 = vpop.f32.mrb[0].mxu0
      %753 = vmatprep.mubr.f32.mxu0 0.0
      %754 = vmatmul.mubr.f32.gmra.mrb[0].mxu0 %v674
      %v755 = vpop.f32.mrb[0].mxu0
      %v756 = vadd.f32 %v660, %v755
      %v757 = vpop.f32.mrb[0].mxu0
      %758 = vmatprep.mubr.f32.mxu0 0.0
      %759 = vmatmul.mubr.f32.gmra.mrb[0].mxu0 %v677
      %v760 = vpop.f32.mrb[0].mxu0
      %v761 = vadd.f32 %v665, %v760
      %v762 = vpop.f32.mrb[0].mxu0
      %763 = vdwg.mxu0
      %v764 = vmax.f32 %v746, 0.0
      %v765 = vmax.f32 %v751, 0.0
      %v766 = vmax.f32 %v756, 0.0
      %v767 = vmax.f32 %v761, 0.0
      %v768 = vld [vmem:[%s6] sm:$0xf]
      %v769 = vld [vmem:[%s7] sm:$0xf]
      %771 = vset.pattern.permute.xlu0 0
      %772 = vperm.xlu0 %771, %v769
      %v773 = vpop.permute.xlu0 %772
      %v776 = vsel %vm537, %v768, 0
      %778 = vmatprep.subr.mxu0 0.0
      %779 = vmatpush1.msra.mxu0 %v764
      %780 = vmatprep.subr.mxu0 0.0
      %781 = vmatpush1.msra.mxu0 %v765
      %782 = vmatprep.subr.mxu0 0.0
      %783 = vmatpush1.msra.mxu0 %v766
      %784 = vmatprep.subr.mxu0 0.0
      %785 = vmatpush1.msra.mxu0 %v767
      %786 = vmatprep.subr.mxu0 0.0
      %787 = vmatpush1.msra.mxu0 0.0
      %788 = vmatprep.subr.mxu0 0.0
      %789 = vmatpush1.msra.mxu0 0.0
      %790 = vmatprep.subr.mxu0 0.0
      %791 = vmatpush1.msra.mxu0 0.0
      %792 = vmatprep.subr.mxu0 0.0
      %793 = vmatpush1.msra.mxu0 0.0
      %794 = vmatprep.subr.mxu0 0.0
      %795 = vmatpush1.msra.mxu0 0.0
      %796 = vmatprep.subr.mxu0 0.0
      %797 = vmatpush1.msra.mxu0 0.0
      %798 = vmatprep.subr.mxu0 0.0
      %799 = vmatpush1.msra.mxu0 0.0
      %800 = vmatprep.subr.mxu0 0.0
      %801 = vmatpush1.msra.mxu0 0.0
      %802 = vmatprep.subr.mxu0 0.0
      %803 = vmatpush1.msra.mxu0 0.0
      %804 = vmatprep.subr.mxu0 0.0
      %805 = vmatpush1.msra.mxu0 0.0
      %806 = vmatprep.subr.mxu0 0.0
      %807 = vmatpush1.msra.mxu0 0.0
      %808 = vmatprep.subr.mxu0 0.0
      %809 = vmatpush1.msra.mxu0 0.0
      %810 = vmatprep.subr.mxu0 0.0
      %811 = vmatpush1.msra.mxu0 0.0
      %812 = vmatprep.subr.mxu0 0.0
      %813 = vmatpush1.msra.mxu0 0.0
      %814 = vmatprep.subr.mxu0 0.0
      %815 = vmatpush1.msra.mxu0 0.0
      %816 = vmatprep.subr.mxu0 0.0
      %817 = vmatpush1.msra.mxu0 0.0
      %818 = vmatprep.subr.mxu0 0.0
      %819 = vmatpush1.msra.mxu0 0.0
      %820 = vmatprep.subr.mxu0 0.0
      %821 = vmatpush1.msra.mxu0 0.0
      %822 = vmatprep.subr.mxu0 0.0
      %823 = vmatpush1.msra.mxu0 0.0
      %824 = vmatprep.subr.mxu0 0.0
      %825 = vmatpush1.msra.mxu0 0.0
      %826 = vmatprep.subr.mxu0 0.0
      %827 = vmatpush1.msra.mxu0 0.0
      %828 = vmatprep.subr.mxu0 0.0
      %829 = vmatpush1.msra.mxu0 0.0
      %830 = vmatprep.subr.mxu0 0.0
      %831 = vmatpush1.msra.mxu0 0.0
      %832 = vmatprep.subr.mxu0 0.0
      %833 = vmatpush1.msra.mxu0 0.0
      %834 = vmatprep.subr.mxu0 0.0
      %835 = vmatpush1.msra.mxu0 0.0
      %836 = vmatprep.subr.mxu0 0.0
      %837 = vmatpush1.msra.mxu0 0.0
      %838 = vmatprep.subr.mxu0 0.0
      %839 = vmatpush1.msra.mxu0 0.0
      %840 = vmatprep.subr.mxu0 0.0
      %841 = vmatpush1.msra.mxu0 0.0
      %842 = vmatprep.mubr.f32.mxu0 0.0
      %843 = vmatmul.mubr.f32.gmra.mrb[0].mxu0 %v776
      %v844 = vpop.f32.mrb[0].mxu0
      %v845 = vadd.f32 %v773, %v844
      %v846 = vpop.f32.mrb[0].mxu0
      %847 = vdwg.mxu0
      %848 = vst [vmem:[%s349] sm:$0xf] %v845
      %p849 = scmp.lt.s32.totalorder %s22, 1
      %s850 = scalar_select %p849, %s22, 1
      %s851 = smul.addr %s850, 4
      %s852 = scalar_lea.vmem %s10, %s851
      // Predicated region
      $region57: #{neural_network_2d_forward.2} parent=55 // pred_check
        %p853 = pneg %p234
      $region58: #{neural_network_2d_forward.2} parent=55 // pred_check_branch
        %855 = sbr.rel (%p853) target = $region60
      $region59: #{neural_network_2d_forward.2} parent=55 // pred_region
        _
      $region60: #{neural_network_2d_forward.2} parent=55 // pred_fallthru
        _
    $region56: #{neural_network_2d_forward.2} parent=5 // pred_fallthru
      _
    %p856 = scmp.le.s32.totalorder 2, %s17
    // Predicated region
    $region61: #{neural_network_2d_forward.2} parent=5 // pred_check
      %p857 = pneg %p856
    $region62: #{neural_network_2d_forward.2} parent=5 // pred_check_branch
      %859 = sbr.rel (%p857) target = $region64
    $region63: #{neural_network_2d_forward.2} parent=5 // pred_region
      %s860 = ssub.s32 %s17, 2
      // Predicated region
      $region65: #{neural_network_2d_forward.2} parent=63 // pred_check
        %p861 = pneg %p240
      $region66: #{neural_network_2d_forward.2} parent=63 // pred_check_branch
        %863 = sbr.rel (%p861) target = $region68
      $region67: #{neural_network_2d_forward.2} parent=63 // pred_region
        %p864 = scmp.lt.s32.totalorder %s23, 1
        %s865 = scalar_select %p864, %s23, 1
        %s866 = smul.addr %s865, 4
        %s867 = scalar_lea.vmem %s10, %s866
      $region68: #{neural_network_2d_forward.2} parent=63 // pred_fallthru
        _
    $region64: #{neural_network_2d_forward.2} parent=5 // pred_fallthru
      _
  $region6: #{neural_network_2d_forward.2} parent=0 // loop_footer
    %s21 = sadd.s32 1, %s17
  $region7: #{neural_network_2d_forward.2} parent=0 // loop_footer_branch
    %16 = sbr.rel target = $region3
  $region8: #{neural_network_2d_forward.2} parent=0 // loop_exit
    _

</llo_original>
